<compile_context>
chip_gen: v6e
topology: v6e:2x2x1
jax: 0.10.0
libtpu: 0.0.40
codegen_flags: <defaults>
</compile_context>

<pallas_src>
import jax
import jax.numpy as jnp
import numpy as np
from jax.experimental import pallas as pl
from jax.experimental.pallas import tpu as pltpu

N_COMPARTMENTS = 2  # central (index 0) + depot (index 1)
LANES = 128


def _compartment_kernel(params_ref, t_ref, c_ref):
    """Evaluate closed-form compartment amounts on one dense time tile.

    params_ref : SMEM f32[4]               -> [k_00, k_10, scale, d] (scalar prefetch)
    t_ref      : VMEM f32[BT, 128]         -> time tile (sublane/lane dense)
    c_ref      : VMEM f32[2, BT, 128]      -> fused output slab
                                              c_ref[0] central, c_ref[1] depot
    """
    k00 = params_ref[0]
    k10 = params_ref[1]
    scale = params_ref[2]   # d * k_10 / (k_00 - k_10), precomputed in wrapper
    d = params_ref[3]

    t = t_ref[...]                  # (BT, 128)
    e10 = jnp.exp(-k10 * t)         # EUP
    e00 = jnp.exp(-k00 * t)

    # Direct slab stores into one fused lane-dense output; no concat/relayout.
    c_ref[1, ...] = d * e10
    c_ref[0, ...] = scale * (e10 - e00)


def compartment_model_forward(t, k_00, k_10, d, *, block_rows=2048):
    """Pallas wrapper. t: f32[T]. Returns f32[n_compartments, T].

    block_rows must be a multiple of 8 (sublane tiling). At the default 2048
    each buffer is a (2048, 128) f32 tile (1 MiB input + 2 MiB output); with
    double buffering that is ~6 MiB VMEM, under the scoped-VMEM default on
    v5e (16 MiB), v6e and v7x (32 MiB).
    """
    assert block_rows % 8 == 0, "block_rows must be a multiple of 8"
    T = int(t.shape[0])
    t = t.astype(jnp.float32)

    k00 = jnp.asarray(k_00, jnp.float32)
    k10 = jnp.asarray(k_10, jnp.float32)
    dose = jnp.asarray(d, jnp.float32)
    # Hoisted scalar algebra (once per call, outside the vector path).
    scale = dose * k10 / (k00 - k10)
    params = jnp.stack([k00, k10, scale, dose])

    # Lane-dense (multiple of 128) and sublane-dense (rows multiple of 8)
    # padding of the time axis, with the grid tiling evenly.
    rows_needed = (T + LANES - 1) // LANES
    rows_needed = ((rows_needed + 7) // 8) * 8
    if rows_needed > block_rows:
        bt = block_rows
        rows = ((rows_needed + bt - 1) // bt) * bt
    elif rows_needed >= 16:
        # Split into (at least) two blocks so dimension_semantics=("parallel",)
        # can shard across v7x's two TensorCores even for small T.
        bt = (((rows_needed + 1) // 2 + 7) // 8) * 8
        rows = 2 * bt
    else:
        bt = rows_needed
        rows = rows_needed

    t_pad_len = rows * LANES
    if t_pad_len == T:
        t_tiled = t.reshape(rows, LANES)          # no pad copy needed
    else:
        t_tiled = jnp.pad(t, (0, t_pad_len - T)).reshape(rows, LANES)

    n_elem = rows * LANES
    cost = pl.CostEstimate(
        flops=5 * n_elem,                          # ~5 VALU ops / element
        transcendentals=2 * n_elem,                # 2 exp / element
        bytes_accessed=(1 + N_COMPARTMENTS) * 4 * n_elem,  # ~12 B / element
    )

    grid = (rows // bt,)
    c = pl.pallas_call(
        _compartment_kernel,
        out_shape=jax.ShapeDtypeStruct((N_COMPARTMENTS, rows, LANES), jnp.float32),
        grid_spec=pltpu.PrefetchScalarGridSpec(
            num_scalar_prefetch=1,                 # params -> SMEM before grid
            grid=grid,
            in_specs=[
                pl.BlockSpec((bt, LANES), lambda i, params: (i, 0)),
            ],
            out_specs=pl.BlockSpec(
                (N_COMPARTMENTS, bt, LANES), lambda i, params: (0, i, 0)),
        ),
        compiler_params=pltpu.CompilerParams(
            dimension_semantics=("parallel",),     # shard time axis on v7x 2-TC
        ),
        cost_estimate=cost,
    )(params, t_tiled)

    # Back to the module's output layout: (n_compartments, T), time on the
    # fast axis, compartment 0 = central (observed), 1 = depot.
    c = c.reshape(N_COMPARTMENTS, -1)
    if t_pad_len != T:
        c = c[:, :T]
    return c


def _reference(t, k_00, k_10, d):
    """Pure-JAX reference of the symbolic solution (what SymPyModule computes)."""
    t = t.astype(jnp.float32)
    e10 = jnp.exp(-k_10 * t)
    e00 = jnp.exp(-k_00 * t)
    c0 = d * k_10 * (e10 - e00) / (k_00 - k_10)
    c1 = d * e10
    return jnp.stack([c0, c1], axis=0)


if __name__ == "__main__":
    key = jax.random.PRNGKey(0)

    # Deterministic example: T not a multiple of 128 (exercises padding) and
    # small enough that the "split into 2 blocks for v7x" path is taken
    # (rows_needed=24 -> bt=16, rows=32, grid=(2,)).
    T = 3000
    t = jnp.sort(jax.random.uniform(key, (T,), jnp.float32, 0.0, 24.0))
    k_00 = 0.15   # elimination rate constant (central)
    k_10 = 1.2    # absorption rate constant (depot -> central)
    d = 100.0     # dose

    out = compartment_model_forward(t, k_00, k_10, d)
    out = jax.block_until_ready(out)

    ref = _reference(t, k_00, k_10, d)
    np.testing.assert_allclose(np.asarray(out), np.asarray(ref),
                               rtol=1e-5, atol=1e-4)
    assert out.shape == (N_COMPARTMENTS, T)

    # Also exercise an exactly-tiled size (no pad / no tail slice path) with
    # a multi-step grid.
    T2 = 8 * LANES * 4          # 4096, rows_needed=32 -> grid=(2,)
    t2 = jnp.linspace(0.0, 48.0, T2, dtype=jnp.float32)
    out2 = jax.block_until_ready(compartment_model_forward(t2, k_00, k_10, d))
    ref2 = _reference(t2, k_00, k_10, d)
    np.testing.assert_allclose(np.asarray(out2), np.asarray(ref2),
                               rtol=1e-5, atol=1e-4)

    print("KERNEL_OK")
</pallas_src>

<mosaic_0001>
module attributes {stable_mosaic.version = 11 : i64} {
  func.func @_compartment_kernel(%arg0: i32, %arg1: memref<4xf32, #tpu.memory_space<smem>>, %arg2: memref<16x128xf32, #tpu.memory_space<vmem>>, %arg3: memref<2x16x128xf32, #tpu.memory_space<vmem>>) attributes {dimension_semantics = [#tpu.dimension_semantics<parallel>], iteration_bounds = array<i64: 2>, scalar_prefetch = 1 : i64, scratch_operands = 0 : i64, tpu.core_type = #tpu.core_type<tc>, window_params = [{transform_indices = @transform_0, window_bounds = array<i64: 16, 128>}, {transform_indices = @transform_1, window_bounds = array<i64: 2, 16, 128>}]} {
    %c0 = arith.constant 0 : index
    %0 = memref.load %arg1[%c0] : memref<4xf32, #tpu.memory_space<smem>>
    %c1 = arith.constant 1 : index
    %1 = memref.load %arg1[%c1] : memref<4xf32, #tpu.memory_space<smem>>
    %c2 = arith.constant 2 : index
    %2 = memref.load %arg1[%c2] : memref<4xf32, #tpu.memory_space<smem>>
    %c3 = arith.constant 3 : index
    %3 = memref.load %arg1[%c3] : memref<4xf32, #tpu.memory_space<smem>>
    %c0_0 = arith.constant 0 : index
    %c0_1 = arith.constant 0 : index
    %4 = vector.load %arg2[%c0_0, %c0_1] : memref<16x128xf32, #tpu.memory_space<vmem>>, vector<16x128xf32>
    %cst = arith.constant 0.000000e+00 : f32
    %5 = arith.subf %cst, %1 : f32
    %6 = vector.broadcast %5 : f32 to vector<16x128xf32>
    %7 = arith.mulf %6, %4 : vector<16x128xf32>
    %8 = math.exp %7 : vector<16x128xf32>
    %cst_2 = arith.constant 0.000000e+00 : f32
    %9 = arith.subf %cst_2, %0 : f32
    %10 = vector.broadcast %9 : f32 to vector<16x128xf32>
    %11 = arith.mulf %10, %4 : vector<16x128xf32>
    %12 = math.exp %11 : vector<16x128xf32>
    %13 = vector.broadcast %3 : f32 to vector<16x128xf32>
    %14 = arith.mulf %13, %8 : vector<16x128xf32>
    %c1_3 = arith.constant 1 : index
    %c0_4 = arith.constant 0 : index
    %c0_5 = arith.constant 0 : index
    %15 = vector.load %arg3[%c1_3, %c0_4, %c0_5] : memref<2x16x128xf32, #tpu.memory_space<vmem>>, vector<1x16x128xf32>
    %16 = vector.shape_cast %15 : vector<1x16x128xf32> to vector<16x128xf32>
    %17 = vector.shape_cast %14 : vector<16x128xf32> to vector<1x16x128xf32>
    tpu.vector_store %arg3[%c1_3, %c0_4, %c0_5], %17 {strides = array<i32>} : memref<2x16x128xf32, #tpu.memory_space<vmem>>, vector<1x16x128xf32>,
    %18 = arith.subf %8, %12 : vector<16x128xf32>
    %19 = vector.broadcast %2 : f32 to vector<16x128xf32>
    %20 = arith.mulf %19, %18 : vector<16x128xf32>
    %c0_6 = arith.constant 0 : index
    %c0_7 = arith.constant 0 : index
    %c0_8 = arith.constant 0 : index
    %21 = vector.load %arg3[%c0_6, %c0_7, %c0_8] : memref<2x16x128xf32, #tpu.memory_space<vmem>>, vector<1x16x128xf32>
    %22 = vector.shape_cast %21 : vector<1x16x128xf32> to vector<16x128xf32>
    %23 = vector.shape_cast %20 : vector<16x128xf32> to vector<1x16x128xf32>
    tpu.vector_store %arg3[%c0_6, %c0_7, %c0_8], %23 {strides = array<i32>} : memref<2x16x128xf32, #tpu.memory_space<vmem>>, vector<1x16x128xf32>,
    return
  }
  func.func @transform_0(%arg0: i32, %arg1: memref<4xf32, #tpu.memory_space<smem>>) -> (i32, i32) {
    %c0_i32 = arith.constant 0 : i32
    %c0_i32_0 = arith.constant 0 : i32
    return %arg0, %c0_i32 : i32, i32
  }
  func.func @transform_1(%arg0: i32, %arg1: memref<4xf32, #tpu.memory_space<smem>>) -> (i32, i32, i32) {
    %c0_i32 = arith.constant 0 : i32
    %c0_i32_0 = arith.constant 0 : i32
    %c0_i32_1 = arith.constant 0 : i32
    return %c0_i32, %arg0, %c0_i32_0 : i32, i32, i32
  }
}

</mosaic_0001>

<llo_original>
// kernel: tpu_custom_call.1
$region0: #{tpu_custom_call.1}
  #allocation0 [shape = 'u32[]', space=smem, size = 0x4, offset = 0x4, fixed_abs, tag = 'smem constant byte address 0x4 - core index']
  #allocation1 [shape = 'u32[144,128]{1,0:T(1,128)}', space=vmem, size = 0x12000, scoped, tag = 'internal scratch']
  #allocation2 [shape = 's32[1]{0}', space=sflag, size = 0x4, scoped, tag = 'scoped memory for tpu_custom_call.1']
  #allocation3 [shape = 'u8[512]{0}', space=smem, size = 0x200, scoped, tag = 'prefetched SMEM operand 0']
  #allocation8 [shape = 's32[]', space=sflag, size = 0x4, offset = 0, fixed_abs, tag = 'sflag constant byte address 0x0 - dummy sync flag']
  %s0 = inlined_call_operand.hbm [shape: f32[4], index: 0, kind: input, shape index: {}]
  %s1 = inlined_call_operand.hbm [shape: f32[32,128], index: 1, kind: input, shape index: {}]
  %s2 = inlined_call_operand.hbm [shape: f32[2,32,128], index: 2, kind: output, shape index: {}]
  %s3 = sld [smem:[#allocation0]]
  $region41: #{tpu_custom_call.1} parent=0
    _
  %s5 = ssub.s32 1, %s3
  %s6 = scalar_select 0, %s5, %s3
  %8 = dma.hbm_to_smem %s0, 16, [#allocation3], [#allocation2]
  %9 = dma.done [#allocation2], 16
  %10 = sfence
  $region1: #{tpu_custom_call.1} parent=0
    #allocation4 [shape = 'u8[16384]{0}', space=vmem, size = 0x4000, scoped, tag = 'input window, operand 1']
    #allocation5 [shape = 's32[2]{0}', space=sflag, size = 0x8, scoped, tag = 'scoped memory for tpu_custom_call.1']
    #allocation6 [shape = 's32[2]{0}', space=sflag, size = 0x8, scoped, tag = 'scoped memory for tpu_custom_call.1']
    #allocation7 [shape = 'u8[32768]{0}', space=vmem, size = 0x8000, scoped, tag = 'output window, operand 0']
    %11 = vsyncpa [#allocation5], 0
    %s12 = scalar_lea.sflag [#allocation5], 1
    %13 = vsyncpa %s12, 0
    %14 = vsyncpa [#allocation6], 0
    %s15 = scalar_lea.sflag [#allocation6], 1
    %16 = vsyncpa %s15, 0
    loop: start=0, step=1, limit=4
    $region2: #{tpu_custom_call.1} parent=1 // loop_pre_header
      _
    $region3: #{tpu_custom_call.1} parent=1 // loop_header
      %s18 = sphi 0, %s22
      %p19 = scmp.ge.s32.totalorder %s18, 4
      %s28 = sphi 0, %s30
      %s31 = sphi 0, %s28
      %s32 = sphi 0, %s31
      %s48 = sphi 0, %s32
      %s54 = sphi 0, %s56
      %s57 = sphi 0, %s54
      %s58 = sphi 0, %s57
      %s74 = sphi 0, %s58
    $region4: #{tpu_custom_call.1} parent=1 // loop_header_branch
      %21 = sbr.rel (%p19) target = $region8
    $region5: #{tpu_custom_call.1} parent=1 // loop_body
      %s23 = ssub.s32 %s18, 1
      %s24 = ssub.s32 %s18, 2
      %s25 = sadd.s32 %s18, 1
      %s26 = ssub.s32 %s18, %s25
      %p27 = scmp.eq.s32.totalorder %s26, 0
      %s29 = sadd.s32 %s28, 1
      %s30 = scalar_select %p27, %s28, %s29
      %p33 = pneg %p27
      %p34 = scmp.eq.s32.totalorder %s18, 1
      %p35 = por %p33, %p34
      %p36 = scmp.ne.s32.totalorder %s28, %s31
      %p37 = scmp.eq.s32.totalorder %s18, 0
      %p38 = por %p36, %p37
      %p39 = scmp.ne.s32.totalorder %s28, %s31
      %p40 = scmp.eq.s32.totalorder %s23, 1
      %p41 = por %p39, %p40
      %p42 = scmp.ne.s32.totalorder %s31, %s32
      %p43 = scmp.eq.s32.totalorder %s23, 0
      %p44 = por %p42, %p43
      %p45 = scmp.ne.s32.totalorder %s31, %s32
      %p46 = scmp.eq.s32.totalorder %s24, 1
      %p47 = por %p45, %p46
      %p49 = scmp.ne.s32.totalorder %s32, %s48
      %p50 = scmp.eq.s32.totalorder %s24, 0
      %p51 = por %p49, %p50
      %s52 = ssub.s32 %s18, %s25
      %p53 = scmp.eq.s32.totalorder %s52, 0
      %s55 = sadd.s32 %s54, 1
      %s56 = scalar_select %p53, %s54, %s55
      %p59 = pneg %p53
      %p60 = scmp.eq.s32.totalorder %s18, 1
      %p61 = por %p59, %p60
      %p62 = scmp.ne.s32.totalorder %s54, %s57
      %p63 = scmp.eq.s32.totalorder %s18, 0
      %p64 = por %p62, %p63
      %p65 = scmp.ne.s32.totalorder %s54, %s57
      %p66 = scmp.eq.s32.totalorder %s23, 1
      %p67 = por %p65, %p66
      %p68 = scmp.ne.s32.totalorder %s57, %s58
      %p69 = scmp.eq.s32.totalorder %s23, 0
      %p70 = por %p68, %p69
      %p71 = scmp.ne.s32.totalorder %s57, %s58
      %p72 = scmp.eq.s32.totalorder %s24, 1
      %p73 = por %p71, %p72
      %p75 = scmp.ne.s32.totalorder %s58, %s74
      %p76 = scmp.eq.s32.totalorder %s24, 0
      %p77 = por %p75, %p76
      %p78 = scmp.le.s32.totalorder 1, %s18
      %p79 = scmp.lt.s32.totalorder %s18, 3
      %p80 = pnand %p78, %p79
      %p81 = pneg %p80
      // Predicated region
      $region9: #{tpu_custom_call.1} parent=5 // pred_check
        _
      $region10: #{tpu_custom_call.1} parent=5 // pred_check_branch
        %83 = sbr.rel (%p80) target = $region12
      $region11: #{tpu_custom_call.1} parent=5 // pred_region
        %s84 = ssub.s32 %s18, 1
      $region12: #{tpu_custom_call.1} parent=5 // pred_fallthru
        _
      %p85 = scmp.lt.s32.totalorder %s18, 2
      // Predicated region
      $region13: #{tpu_custom_call.1} parent=5 // pred_check
        %p86 = pneg %p85
      $region14: #{tpu_custom_call.1} parent=5 // pred_check_branch
        %88 = sbr.rel (%p86) target = $region16
      $region15: #{tpu_custom_call.1} parent=5 // pred_region
        // Predicated region
        $region17: #{tpu_custom_call.1} parent=15 // pred_check
          %p89 = pneg %p38
        $region18: #{tpu_custom_call.1} parent=15 // pred_check_branch
          %91 = sbr.rel (%p89) target = $region20
        $region19: #{tpu_custom_call.1} parent=15 // pred_region
          %s92 = sand.u32 %s28, 1
          %s93 = scalar_lea.sflag [#allocation5], %s92
          %s94 = sand.u32 %s28, 1
          %s95 = smul.addr %s94, 16
          %s96 = scalar_lea.vmem [#allocation4], %s95
          %s97 = smul.u32 2, %s18
          %s99 = ssub.s32 256, 256
          %100 = vsyncadd %s93, %s99
          %s101 = smul.addr %s97, 128
          %s102 = scalar_lea.hbm %s1, %s101
          %s103 = sshll.u32 %s96, 4
          %s104 = int_to_ptr.vmem [resolvable:$true] %s103
          %109 = dma.hbm_to_vmem [thread:$0]  %s102, 256, %s104, %s93, 128, 128, 8
        $region20: #{tpu_custom_call.1} parent=15 // pred_fallthru
          _
      $region16: #{tpu_custom_call.1} parent=5 // pred_fallthru
        _
      %p110 = scmp.le.s32.totalorder 1, %s18
      %p111 = scmp.lt.s32.totalorder %s18, 3
      %p112 = pnand %p110, %p111
      %p113 = pneg %p112
      // Predicated region
      $region21: #{tpu_custom_call.1} parent=5 // pred_check
        _
      $region22: #{tpu_custom_call.1} parent=5 // pred_check_branch
        %115 = sbr.rel (%p112) target = $region24
      $region23: #{tpu_custom_call.1} parent=5 // pred_region
        %s116 = ssub.s32 %s18, 1
        %s117 = sand.u32 %s31, 1
        %s118 = scalar_lea.sflag [#allocation5], %s117
        %s119 = sand.u32 %s31, 1
        %s120 = smul.addr %s119, 16
        %s121 = scalar_lea.vmem [#allocation4], %s120
        // Predicated region
        $region25: #{tpu_custom_call.1} parent=23 // pred_check
          %p122 = pneg %p44
        $region26: #{tpu_custom_call.1} parent=23 // pred_check_branch
          %124 = sbr.rel (%p122) target = $region28
        $region27: #{tpu_custom_call.1} parent=23 // pred_region
          %125 = dma.done %s118, 256
        $region28: #{tpu_custom_call.1} parent=23 // pred_fallthru
          _
        %s126 = sand.u32 %s31, 1
        %s127 = scalar_lea.sflag [#allocation5], %s126
        %s128 = sand.u32 %s31, 1
        %s129 = smul.addr %s128, 16
        %s130 = scalar_lea.vmem [#allocation4], %s129
        %p131 = pneg %p44
        %p132 = pneg %p41
        %p133 = pneg %p70
        %p134 = pneg %p67
        %s135 = sand.u32 %s57, 1
        %s136 = scalar_lea.sflag [#allocation6], %s135
        %s137 = sand.u32 %s57, 1
        %s138 = smul.addr %s137, 32
        %s139 = scalar_lea.vmem [#allocation7], %s138
        %s140 = smul.u32 2, %s23
        %s141 = smul.u32 2, %s23
        %s142 = sld [smem:[#allocation3]]
        %s143 = sld [smem:[#allocation3 + $0x1]]
        %s144 = sld [smem:[#allocation3 + $0x2]]
        %s145 = sld [smem:[#allocation3 + $0x3]]
        %v146 = vld [vmem:[%s121] sm:$0xff]
        %v147 = vld [vmem:[%s121 + $0x8] sm:$0xff]
        %s148 = ssub.f32 0.0, %s143
        %v149 = vstv %s148
        %v150 = vmul.f32 %v149, %v146
        %v151 = vmul.f32 %v149, %v147
        %v152 = vmul.f32 %v150, 1.442695
        %v153 = vpow.pop %v152
        %v154 = vmul.f32 %v151, 1.442695
        %v155 = vpow.pop %v154
        %s156 = ssub.f32 0.0, %s142
        %v157 = vstv %s156
        %v158 = vmul.f32 %v157, %v146
        %v159 = vmul.f32 %v157, %v147
        %v160 = vmul.f32 %v158, 1.442695
        %v161 = vpow.pop %v160
        %v162 = vmul.f32 %v159, 1.442695
        %v163 = vpow.pop %v162
        %v164 = vstv %s145
        %v165 = vmul.f32 %v164, %v153
        %v166 = vmul.f32 %v164, %v155
        %s167 = scalar_lea.vmem %s139, 16 [#allocation7]
        %168 = vst [vmem:[%s167] sm:$0xff] %v165
        %169 = vst [vmem:[%s167 + $0x8] sm:$0xff] %v166
        %v170 = vsub.f32 %v153, %v161
        %v171 = vsub.f32 %v155, %v163
        %v172 = vstv %s144
        %v173 = vmul.f32 %v172, %v170
        %v174 = vmul.f32 %v172, %v171
        %175 = vst [vmem:[%s139] sm:$0xff] %v173
        %176 = vst [vmem:[%s139 + $0x8] sm:$0xff] %v174
        %s177 = sand.u32 %s57, 1
        %s178 = scalar_lea.sflag [#allocation6], %s177
        %s179 = sand.u32 %s57, 1
        %s180 = smul.addr %s179, 32
        %s181 = scalar_lea.vmem [#allocation7], %s180
        // Predicated region
        $region29: #{tpu_custom_call.1} parent=23 // pred_check
          %p182 = pneg %p67
        $region30: #{tpu_custom_call.1} parent=23 // pred_check_branch
          %184 = sbr.rel (%p182) target = $region32
        $region31: #{tpu_custom_call.1} parent=23 // pred_region
          #allocation9 [shape = 'u32[6]{0}', space=smem, size = 0x18, scoped, tag = 'DMA stride descriptor']
          %s185 = smul.u32 2, %s23
          %s187 = ssub.s32 512, 512
          %188 = vsyncadd %s178, %s187
          %s189 = smul.addr %s185, 128
          %s190 = scalar_lea.hbm %s2, %s189
          %s192 = sshll.u32 1, 14
          %s193 = sxor.u32 4294967295, %s192
          %s196 = sshll.u32 7, 18
          %s197 = sxor.u32 4294967295, %s196
          %s198 = sand.u32 0, %s197
          %s200 = sor.u32 %s198, 0
          %s201 = sshll.u32 %s181, 4
          %s202 = int_to_ptr.vmem [resolvable:$true] %s201
          %208 = sst [smem:[#allocation9]] 256
          %s209 = scalar_lea.smem [#allocation9], 1
          %210 = sst [smem:[%s209]] 512
          %s211 = scalar_lea.smem [#allocation9], 2
          %212 = sst [smem:[%s211]] 2
          %s213 = scalar_lea.smem [#allocation9], 3
          %214 = sst [smem:[%s213]] 128
          %s215 = scalar_lea.smem [#allocation9], 4
          %216 = sst [smem:[%s215]] 128
          %s217 = scalar_lea.smem [#allocation9], 5
          %218 = sst [smem:[%s217]] 8
          %220 = dma.general %s202, 512, %s190, %s178, 131072, [#allocation9], %s200, 0
        $region32: #{tpu_custom_call.1} parent=23 // pred_fallthru
          _
      $region24: #{tpu_custom_call.1} parent=5 // pred_fallthru
        _
      %p221 = scmp.le.s32.totalorder 2, %s18
      // Predicated region
      $region33: #{tpu_custom_call.1} parent=5 // pred_check
        %p222 = pneg %p221
      $region34: #{tpu_custom_call.1} parent=5 // pred_check_branch
        %224 = sbr.rel (%p222) target = $region36
      $region35: #{tpu_custom_call.1} parent=5 // pred_region
        %s225 = ssub.s32 %s18, 2
        // Predicated region
        $region37: #{tpu_custom_call.1} parent=35 // pred_check
          %p226 = pneg %p73
        $region38: #{tpu_custom_call.1} parent=35 // pred_check_branch
          %228 = sbr.rel (%p226) target = $region40
        $region39: #{tpu_custom_call.1} parent=35 // pred_region
          %s229 = sand.u32 %s58, 1
          %s230 = scalar_lea.sflag [#allocation6], %s229
          %s231 = sand.u32 %s58, 1
          %s232 = smul.addr %s231, 32
          %s233 = scalar_lea.vmem [#allocation7], %s232
          %234 = dma.done %s230, 512
        $region40: #{tpu_custom_call.1} parent=35 // pred_fallthru
          _
      $region36: #{tpu_custom_call.1} parent=5 // pred_fallthru
        _
    $region6: #{tpu_custom_call.1} parent=1 // loop_footer
      %s22 = sadd.s32 1, %s18
    $region7: #{tpu_custom_call.1} parent=1 // loop_footer_branch
      %17 = sbr.rel target = $region3
    $region8: #{tpu_custom_call.1} parent=1 // loop_exit
      _
    %235 = vsyncpa [#allocation5], 1
    %s236 = scalar_lea.sflag [#allocation5], 1
    %237 = vsyncpa %s236, 1
    %238 = vsyncpa [#allocation6], 1
    %s239 = scalar_lea.sflag [#allocation6], 1
    %240 = vsyncpa %s239, 1

</llo_original>
